<compile_context>
chip_gen: v7x
topology: tpu7x:2x2x1
jax: 0.10.0
libtpu: 0.0.40
codegen_flags: <defaults>
</compile_context>

<pallas_src>
import jax
import jax.numpy as jnp
from jax.experimental import pallas as pl
from jax.experimental.pallas import tpu as pltpu


def _round_up(x, m):
    return (x + m - 1) // m * m


def _make_decoder_kernel(alpha):
    def kernel(z_ref, c_ref, w1a_ref, w1b_ref, b1_ref, w2_ref, b2_ref, o_ref):
        # TODO(synk): nn.Dropout(p=dropout) is identity here (p=0 / eval mode).
        # fc1 split across the concat boundary: [z|cond] @ W1 = z @ W1a + cond @ W1b.
        # Activations arrive bf16; cast up so the MXU accumulates in f32.
        h = (jnp.dot(z_ref[...].astype(jnp.float32), w1a_ref[...],
                     preferred_element_type=jnp.float32)
             + jnp.dot(c_ref[...].astype(jnp.float32), w1b_ref[...],
                       preferred_element_type=jnp.float32)
             + b1_ref[...])
        h = jnp.where(h >= 0, h, alpha * h)                      # LeakyReLU
        y = jnp.dot(h, w2_ref[...], preferred_element_type=jnp.float32) + b2_ref[...]
        # sigmoid: exp and the approx reciprocal both land on the EUP slot.
        o_ref[...] = pl.reciprocal(1.0 + jnp.exp(-y), approx=True).astype(o_ref.dtype)

    return kernel


def decoder_forward(z, cond, w1, b1, w2, b2, *, alpha=0.03, batch_tile=2048,
                    act_dtype=jnp.bfloat16):
    """Fused CVAE decoder forward.

    z:    (B, n_latent)  f32
    cond: (B, input_dim) f32
    w1:   (n_latent + input_dim, n_hidden)   pre-transposed (in, out)
    b1:   (n_hidden,) or (1, n_hidden)
    w2:   (n_hidden, input_dim)              pre-transposed (in, out)
    b2:   (input_dim,) or (1, input_dim)
    returns (B, input_dim) f32
    """
    B, n_latent = z.shape
    Bc, input_dim = cond.shape
    assert B == Bc
    d_in = n_latent + input_dim
    n_hidden = w1.shape[1]
    assert w1.shape[0] == d_in and w2.shape == (n_hidden, input_dim)

    # Lane-dense padding only for the hidden/output feature axes (the output
    # store must be unmasked); z/cond keep their small unpadded feature dims.
    h_p = _round_up(n_hidden, 128)
    d_out_p = _round_up(input_dim, 128)

    # Batch tiling: multiple of 16 (bf16 sublane packing), large enough to
    # amortize per-grid-step overhead, small enough for the v5e VMEM budget.
    tb = _round_up(min(batch_tile, _round_up(B, 16)), 16)
    b_p = _round_up(B, tb)
    # v7x megacore: prefer >= 2 grid steps so both TensorCores get work.
    if b_p // tb < 2 and tb >= 32:
        tb = _round_up(tb // 2, 16)
        b_p = _round_up(B, tb)
    grid = (b_p // tb,)

    # Activations: bf16 I/O, padded along batch only. No concat, no x_p.
    z_p = jnp.pad(z.astype(act_dtype), ((0, b_p - B), (0, 0)))
    c_p = jnp.pad(cond.astype(act_dtype), ((0, b_p - B), (0, 0)))

    # Weights/biases stay f32 (VMEM-resident); zero-padded extra columns/rows
    # guarantee the padded lanes contribute nothing to the real outputs.
    w1f = w1.astype(jnp.float32)
    w1a = jnp.pad(w1f[:n_latent], ((0, 0), (0, h_p - n_hidden)))
    w1b = jnp.pad(w1f[n_latent:], ((0, 0), (0, h_p - n_hidden)))
    b1_p = jnp.pad(jnp.reshape(b1, (1, -1)).astype(jnp.float32),
                   ((0, 0), (0, h_p - n_hidden)))
    w2_p = jnp.pad(w2.astype(jnp.float32),
                   ((0, h_p - n_hidden), (0, d_out_p - input_dim)))
    b2_p = jnp.pad(jnp.reshape(b2, (1, -1)).astype(jnp.float32),
                   ((0, 0), (0, d_out_p - input_dim)))

    act_bytes = jnp.dtype(act_dtype).itemsize
    cost = pl.CostEstimate(
        flops=int(2 * b_p * (d_in * h_p + h_p * d_out_p)),
        transcendentals=int(b_p * d_out_p),
        bytes_accessed=int((z_p.size + c_p.size + b_p * d_out_p) * act_bytes
                           + 4 * (w1a.size + w1b.size + b1_p.size
                                  + w2_p.size + b2_p.size)),
    )

    out_p = pl.pallas_call(
        _make_decoder_kernel(alpha),
        out_shape=jax.ShapeDtypeStruct((b_p, d_out_p), act_dtype),
        grid=grid,
        in_specs=[
            # activations: tiled along batch, double-buffered HBM<->VMEM
            pl.BlockSpec((tb, n_latent), lambda i: (i, 0)),
            pl.BlockSpec((tb, input_dim), lambda i: (i, 0)),
            # weights / biases: VMEM-resident across all grid steps
            pl.BlockSpec((n_latent, h_p), lambda i: (0, 0)),
            pl.BlockSpec((input_dim, h_p), lambda i: (0, 0)),
            pl.BlockSpec((1, h_p), lambda i: (0, 0)),
            pl.BlockSpec((h_p, d_out_p), lambda i: (0, 0)),
            pl.BlockSpec((1, d_out_p), lambda i: (0, 0)),
        ],
        out_specs=pl.BlockSpec((tb, d_out_p), lambda i: (i, 0)),
        compiler_params=pltpu.CompilerParams(
            dimension_semantics=("parallel",),  # megacore sharding on v7x
        ),
        cost_estimate=cost,
    )(z_p, c_p, w1a, w1b, b1_p, w2_p, b2_p)

    # Slice away batch/feature padding; cast back to f32 to match the module.
    return out_p[:B, :input_dim].astype(jnp.float32)


def decoder_reference(z, cond, w1, b1, w2, b2, *, alpha=0.03):
    x = jnp.concatenate([z, cond], axis=1)
    h = x @ w1 + jnp.reshape(b1, (1, -1))
    h = jnp.where(h >= 0, h, alpha * h)
    y = h @ w2 + jnp.reshape(b2, (1, -1))
    return jax.nn.sigmoid(y)


if __name__ == "__main__":
    # Small shapes consistent with the module's forward.
    B = 8           # batch
    n_latent = 8    # latent dim
    input_dim = 16  # data feature dim (data.shape[1])
    n_hidden = 32   # hidden width
    alpha = 0.03    # module default negative_slope

    key = jax.random.PRNGKey(0)
    kz, kc, kw1, kb1, kw2, kb2 = jax.random.split(key, 6)

    z = jax.random.normal(kz, (B, n_latent), dtype=jnp.float32)
    cond = jax.random.normal(kc, (B, input_dim), dtype=jnp.float32)

    # Parameters stored pre-transposed as (in, out) for the kernel.
    w1 = 0.1 * jax.random.normal(kw1, (n_latent + input_dim, n_hidden), dtype=jnp.float32)
    b1 = 0.1 * jax.random.normal(kb1, (1, n_hidden), dtype=jnp.float32)
    w2 = 0.1 * jax.random.normal(kw2, (n_hidden, input_dim), dtype=jnp.float32)
    b2 = 0.1 * jax.random.normal(kb2, (1, input_dim), dtype=jnp.float32)

    out = decoder_forward(z, cond, w1, b1, w2, b2, alpha=alpha)
    out = jax.block_until_ready(out)
    ref = decoder_reference(z, cond, w1, b1, w2, b2, alpha=alpha)
    assert out.shape == (B, input_dim)
    # bf16 activation I/O + EUP approximate reciprocal in the sigmoid:
    # observed error is a few 1e-3 on outputs in [0, 1]; tolerance relaxed.
    assert jnp.allclose(out, ref, atol=2e-2, rtol=2e-2), "mismatch vs reference"

    # Second config: non-multiple-of-16 batch with a multi-step grid, to
    # exercise the batch-padding and pipelined (>=2 steps) paths.
    B2 = 300
    z2 = jax.random.normal(kz, (B2, n_latent), dtype=jnp.float32)
    cond2 = jax.random.normal(kc, (B2, input_dim), dtype=jnp.float32)
    out2 = jax.block_until_ready(
        decoder_forward(z2, cond2, w1, b1, w2, b2, alpha=alpha, batch_tile=128))
    ref2 = decoder_reference(z2, cond2, w1, b1, w2, b2, alpha=alpha)
    assert out2.shape == (B2, input_dim)
    assert jnp.allclose(out2, ref2, atol=2e-2, rtol=2e-2), "mismatch vs reference (B=300)"

    print("KERNEL_OK")
</pallas_src>

<mosaic_0001>
module attributes {stable_mosaic.version = 11 : i64} {
  func.func @kernel(%arg0: i32, %arg1: memref<16x8xbf16, #tpu.memory_space<vmem>>, %arg2: memref<16x16xbf16, #tpu.memory_space<vmem>>, %arg3: memref<8x128xf32, #tpu.memory_space<vmem>>, %arg4: memref<16x128xf32, #tpu.memory_space<vmem>>, %arg5: memref<1x128xf32, #tpu.memory_space<vmem>>, %arg6: memref<128x128xf32, #tpu.memory_space<vmem>>, %arg7: memref<1x128xf32, #tpu.memory_space<vmem>>, %arg8: memref<16x128xbf16, #tpu.memory_space<vmem>>) attributes {dimension_semantics = [#tpu.dimension_semantics<parallel>], iteration_bounds = array<i64: 1>, scalar_prefetch = 0 : i64, scratch_operands = 0 : i64, tpu.core_type = #tpu.core_type<tc>, window_params = [{transform_indices = @transform_0, window_bounds = array<i64: 16, 8>}, {transform_indices = @transform_1, window_bounds = array<i64: 16, 16>}, {pipeline_mode = #tpu.pipeline_mode<synchronous>, transform_indices = @transform_2, window_bounds = array<i64: 8, 128>}, {pipeline_mode = #tpu.pipeline_mode<synchronous>, transform_indices = @transform_3, window_bounds = array<i64: 16, 128>}, {pipeline_mode = #tpu.pipeline_mode<synchronous>, transform_indices = @transform_4, window_bounds = array<i64: 1, 128>}, {pipeline_mode = #tpu.pipeline_mode<synchronous>, transform_indices = @transform_5, window_bounds = array<i64: 128, 128>}, {pipeline_mode = #tpu.pipeline_mode<synchronous>, transform_indices = @transform_6, window_bounds = array<i64: 1, 128>}, {transform_indices = @transform_7, window_bounds = array<i64: 16, 128>}]} {
    %c0 = arith.constant 0 : index
    %c0_0 = arith.constant 0 : index
    %0 = vector.load %arg1[%c0, %c0_0] : memref<16x8xbf16, #tpu.memory_space<vmem>>, vector<16x8xbf16>
    %1 = arith.extf %0 : vector<16x8xbf16> to vector<16x8xf32>
    %c0_1 = arith.constant 0 : index
    %c0_2 = arith.constant 0 : index
    %2 = vector.load %arg3[%c0_1, %c0_2] : memref<8x128xf32, #tpu.memory_space<vmem>>, vector<8x128xf32>
    %cst = arith.constant dense<0.000000e+00> : vector<16x128xf32>
    %3 = tpu.matmul %1, %2, %cst {dimension_numbers = #tpu.dot_dimension_numbers<[1], [0], [0], [1], [0, 0, 1, 1], [], []>} : vector<16x8xf32>, vector<8x128xf32>, vector<16x128xf32> -> vector<16x128xf32>
    %c0_3 = arith.constant 0 : index
    %c0_4 = arith.constant 0 : index
    %4 = vector.load %arg2[%c0_3, %c0_4] : memref<16x16xbf16, #tpu.memory_space<vmem>>, vector<16x16xbf16>
    %5 = arith.extf %4 : vector<16x16xbf16> to vector<16x16xf32>
    %c0_5 = arith.constant 0 : index
    %c0_6 = arith.constant 0 : index
    %6 = vector.load %arg4[%c0_5, %c0_6] : memref<16x128xf32, #tpu.memory_space<vmem>>, vector<16x128xf32>
    %cst_7 = arith.constant dense<0.000000e+00> : vector<16x128xf32>
    %7 = tpu.matmul %5, %6, %cst_7 {dimension_numbers = #tpu.dot_dimension_numbers<[1], [0], [0], [1], [0, 0, 1, 1], [], []>} : vector<16x16xf32>, vector<16x128xf32>, vector<16x128xf32> -> vector<16x128xf32>
    %8 = arith.addf %3, %7 : vector<16x128xf32>
    %c0_8 = arith.constant 0 : index
    %c0_9 = arith.constant 0 : index
    %9 = vector.load %arg5[%c0_8, %c0_9] : memref<1x128xf32, #tpu.memory_space<vmem>>, vector<1x128xf32>
    %10 = vector.broadcast %9 : vector<1x128xf32> to vector<16x128xf32>
    %11 = arith.addf %8, %10 : vector<16x128xf32>
    %cst_10 = arith.constant 0.000000e+00 : f32
    %12 = vector.broadcast %cst_10 : f32 to vector<16x128xf32>
    %13 = arith.cmpf oge, %11, %12 : vector<16x128xf32>
    %cst_11 = arith.constant 3.000000e-02 : f32
    %14 = vector.broadcast %cst_11 : f32 to vector<16x128xf32>
    %15 = arith.mulf %14, %11 : vector<16x128xf32>
    %16 = arith.select %13, %11, %15 : vector<16x128xi1>, vector<16x128xf32>
    %c0_12 = arith.constant 0 : index
    %c0_13 = arith.constant 0 : index
    %17 = vector.load %arg6[%c0_12, %c0_13] : memref<128x128xf32, #tpu.memory_space<vmem>>, vector<128x128xf32>
    %cst_14 = arith.constant dense<0.000000e+00> : vector<16x128xf32>
    %18 = tpu.matmul %16, %17, %cst_14 {dimension_numbers = #tpu.dot_dimension_numbers<[1], [0], [0], [1], [0, 0, 1, 1], [], []>} : vector<16x128xf32>, vector<128x128xf32>, vector<16x128xf32> -> vector<16x128xf32>
    %c0_15 = arith.constant 0 : index
    %c0_16 = arith.constant 0 : index
    %19 = vector.load %arg7[%c0_15, %c0_16] : memref<1x128xf32, #tpu.memory_space<vmem>>, vector<1x128xf32>
    %20 = vector.broadcast %19 : vector<1x128xf32> to vector<16x128xf32>
    %21 = arith.addf %18, %20 : vector<16x128xf32>
    %cst_17 = arith.constant 0.000000e+00 : f32
    %22 = vector.broadcast %cst_17 : f32 to vector<16x128xf32>
    %23 = arith.subf %22, %21 : vector<16x128xf32>
    %24 = math.exp %23 : vector<16x128xf32>
    %cst_18 = arith.constant 1.000000e+00 : f32
    %25 = vector.broadcast %cst_18 : f32 to vector<16x128xf32>
    %26 = arith.addf %25, %24 : vector<16x128xf32>
    %27 = tpu.reciprocal %26 {approx = true} : vector<16x128xf32> -> vector<16x128xf32>
    %28 = arith.truncf %27 : vector<16x128xf32> to vector<16x128xbf16>
    %c0_19 = arith.constant 0 : index
    %c0_20 = arith.constant 0 : index
    %29 = vector.load %arg8[%c0_19, %c0_20] : memref<16x128xbf16, #tpu.memory_space<vmem>>, vector<16x128xbf16>
    tpu.vector_store %arg8[%c0_19, %c0_20], %28 {strides = array<i32>} : memref<16x128xbf16, #tpu.memory_space<vmem>>, vector<16x128xbf16>,
    return
  }
  func.func @transform_0(%arg0: i32) -> (i32, i32) {
    %c0_i32 = arith.constant 0 : i32
    %c0_i32_0 = arith.constant 0 : i32
    return %arg0, %c0_i32 : i32, i32
  }
  func.func @transform_1(%arg0: i32) -> (i32, i32) {
    %c0_i32 = arith.constant 0 : i32
    %c0_i32_0 = arith.constant 0 : i32
    return %arg0, %c0_i32 : i32, i32
  }
  func.func @transform_2(%arg0: i32) -> (i32, i32) {
    %c0_i32 = arith.constant 0 : i32
    %c0_i32_0 = arith.constant 0 : i32
    %c0_i32_1 = arith.constant 0 : i32
    return %c0_i32, %c0_i32_0 : i32, i32
  }
  func.func @transform_3(%arg0: i32) -> (i32, i32) {
    %c0_i32 = arith.constant 0 : i32
    %c0_i32_0 = arith.constant 0 : i32
    %c0_i32_1 = arith.constant 0 : i32
    return %c0_i32, %c0_i32_0 : i32, i32
  }
  func.func @transform_4(%arg0: i32) -> (i32, i32) {
    %c0_i32 = arith.constant 0 : i32
    %c0_i32_0 = arith.constant 0 : i32
    %c0_i32_1 = arith.constant 0 : i32
    return %c0_i32, %c0_i32_0 : i32, i32
  }
  func.func @transform_5(%arg0: i32) -> (i32, i32) {
    %c0_i32 = arith.constant 0 : i32
    %c0_i32_0 = arith.constant 0 : i32
    %c0_i32_1 = arith.constant 0 : i32
    return %c0_i32, %c0_i32_0 : i32, i32
  }
  func.func @transform_6(%arg0: i32) -> (i32, i32) {
    %c0_i32 = arith.constant 0 : i32
    %c0_i32_0 = arith.constant 0 : i32
    %c0_i32_1 = arith.constant 0 : i32
    return %c0_i32, %c0_i32_0 : i32, i32
  }
  func.func @transform_7(%arg0: i32) -> (i32, i32) {
    %c0_i32 = arith.constant 0 : i32
    %c0_i32_0 = arith.constant 0 : i32
    return %arg0, %c0_i32 : i32, i32
  }
}

</mosaic_0001>

<llo_original>
// kernel: tpu_custom_call.1
$region0: #{tpu_custom_call.1}
  #allocation0 [shape = 'u32[]', space=smem, size = 0x4, offset = 0x4, fixed_abs, tag = 'smem constant byte address 0x4 - core index']
  #allocation1 [shape = 'u32[144,128]{1,0:T(1,128)}', space=vmem, size = 0x12000, scoped, tag = 'internal scratch']
  %s0 = inlined_call_operand.vmem [shape: bf16[16,8], index: 0, kind: input, shape index: {}]
  %s1 = inlined_call_operand.hbm [shape: bf16[16,16], index: 1, kind: input, shape index: {}]
  %s2 = inlined_call_operand.hbm [shape: f32[8,128], index: 2, kind: input, shape index: {}]
  %s3 = inlined_call_operand.vmem [shape: f32[16,128], index: 3, kind: input, shape index: {}]
  %s4 = inlined_call_operand.vmem [shape: f32[1,128], index: 4, kind: input, shape index: {}]
  %s5 = inlined_call_operand.hbm [shape: f32[128,128], index: 5, kind: input, shape index: {}]
  %s6 = inlined_call_operand.vmem [shape: f32[1,128], index: 6, kind: input, shape index: {}]
  %s7 = inlined_call_operand.hbm [shape: bf16[16,128], index: 7, kind: output, shape index: {}]
  %s8 = sld [smem:[#allocation0]]
  $region50: #{tpu_custom_call.1} parent=0
    _
  %s10 = ssub.s32 1, %s8
  %s11 = scalar_select 0, %s10, %s8
  $region1: #{tpu_custom_call.1} parent=0
    #allocation2 [shape = 'u8[4096]{0}', space=vmem, size = 0x1000, scoped, tag = 'input window, operand 1, single buffered']
    #allocation3 [shape = 's32[1]{0}', space=sflag, size = 0x4, scoped, tag = 'scoped memory for tpu_custom_call.1']
    #allocation4 [shape = 's32[1]{0}', space=sflag, size = 0x4, scoped, tag = 'scoped memory for tpu_custom_call.1']
    #allocation5 [shape = 'u8[4096]{0}', space=vmem, size = 0x1000, scoped, tag = 'input window, operand 2, single buffered']
    #allocation6 [shape = 's32[1]{0}', space=sflag, size = 0x4, scoped, tag = 'scoped memory for tpu_custom_call.1']
    #allocation7 [shape = 'u8[65536]{0}', space=vmem, size = 0x10000, scoped, tag = 'input window, operand 5, single buffered']
    #allocation8 [shape = 'u8[4096]{0}', space=vmem, size = 0x1000, scoped, tag = 'output window, operand 0, single buffered']
    %12 = vsyncpa [#allocation3], 0
    %13 = vsyncpa [#allocation6], 0
    %14 = vsyncpa [#allocation4], 0
    // Predicated region
    $region2: #{tpu_custom_call.1} parent=1 // pred_check
      _
    $region3: #{tpu_custom_call.1} parent=1 // pred_check_branch
      %16 = sbr.rel (0) target = $region5
    $region4: #{tpu_custom_call.1} parent=1 // pred_region
      _
    $region5: #{tpu_custom_call.1} parent=1 // pred_fallthru
      _
    // Predicated region
    $region6: #{tpu_custom_call.1} parent=1 // pred_check
      _
    $region7: #{tpu_custom_call.1} parent=1 // pred_check_branch
      %18 = sbr.rel (0) target = $region9
    $region8: #{tpu_custom_call.1} parent=1 // pred_region
      %s20 = ssub.s32 128, 128
      %21 = vsyncadd [#allocation3], %s20
      %s22 = sshll.u32 [#allocation2], 4
      %s23 = int_to_ptr.vmem [resolvable:$true] %s22
      %28 = dma.hbm_to_vmem [thread:$0]  %s1, 128, %s23, [#allocation3], 64, 64, 4
    $region9: #{tpu_custom_call.1} parent=1 // pred_fallthru
      _
    // Predicated region
    $region10: #{tpu_custom_call.1} parent=1 // pred_check
      _
    $region11: #{tpu_custom_call.1} parent=1 // pred_check_branch
      %30 = sbr.rel (0) target = $region13
    $region12: #{tpu_custom_call.1} parent=1 // pred_region
      %s32 = ssub.s32 128, 128
      %33 = vsyncadd [#allocation6], %s32
      %s35 = sshll.u32 [#allocation5], 4
      %s36 = int_to_ptr.vmem [resolvable:$true] %s35
      %38 = dma.hbm_to_vmem [thread:$0]  %s2, 128, %s36, [#allocation6]
    $region13: #{tpu_custom_call.1} parent=1 // pred_fallthru
      _
    // Predicated region
    $region14: #{tpu_custom_call.1} parent=1 // pred_check
      _
    $region15: #{tpu_custom_call.1} parent=1 // pred_check_branch
      %40 = sbr.rel (0) target = $region17
    $region16: #{tpu_custom_call.1} parent=1 // pred_region
      _
    $region17: #{tpu_custom_call.1} parent=1 // pred_fallthru
      _
    // Predicated region
    $region18: #{tpu_custom_call.1} parent=1 // pred_check
      _
    $region19: #{tpu_custom_call.1} parent=1 // pred_check_branch
      %42 = sbr.rel (0) target = $region21
    $region20: #{tpu_custom_call.1} parent=1 // pred_region
      _
    $region21: #{tpu_custom_call.1} parent=1 // pred_fallthru
      _
    // Predicated region
    $region22: #{tpu_custom_call.1} parent=1 // pred_check
      _
    $region23: #{tpu_custom_call.1} parent=1 // pred_check_branch
      %44 = sbr.rel (0) target = $region25
    $region24: #{tpu_custom_call.1} parent=1 // pred_region
      %s46 = ssub.s32 2048, 2048
      %47 = vsyncadd [#allocation6], %s46
      %s48 = sshll.u32 [#allocation7], 4
      %s49 = int_to_ptr.vmem [resolvable:$true] %s48
      %54 = dma.hbm_to_vmem [thread:$0]  %s5, 2048, %s49, [#allocation6], 128, 128, 8
    $region25: #{tpu_custom_call.1} parent=1 // pred_fallthru
      _
    // Predicated region
    $region26: #{tpu_custom_call.1} parent=1 // pred_check
      _
    $region27: #{tpu_custom_call.1} parent=1 // pred_check_branch
      %56 = sbr.rel (0) target = $region29
    $region28: #{tpu_custom_call.1} parent=1 // pred_region
      _
    $region29: #{tpu_custom_call.1} parent=1 // pred_fallthru
      _
    // Predicated region
    $region30: #{tpu_custom_call.1} parent=1 // pred_check
      _
    $region31: #{tpu_custom_call.1} parent=1 // pred_check_branch
      %58 = sbr.rel (0) target = $region33
    $region32: #{tpu_custom_call.1} parent=1 // pred_region
      %59 = dma.done [#allocation3], 128
    $region33: #{tpu_custom_call.1} parent=1 // pred_fallthru
      _
    // Predicated region
    $region34: #{tpu_custom_call.1} parent=1 // pred_check
      _
    $region35: #{tpu_custom_call.1} parent=1 // pred_check_branch
      %61 = sbr.rel (0) target = $region37
    $region36: #{tpu_custom_call.1} parent=1 // pred_region
      %62 = dma.done [#allocation6], 128
    $region37: #{tpu_custom_call.1} parent=1 // pred_fallthru
      _
    // Predicated region
    $region38: #{tpu_custom_call.1} parent=1 // pred_check
      _
    $region39: #{tpu_custom_call.1} parent=1 // pred_check_branch
      %64 = sbr.rel (0) target = $region41
    $region40: #{tpu_custom_call.1} parent=1 // pred_region
      %65 = dma.done [#allocation6], 2048
    $region41: #{tpu_custom_call.1} parent=1 // pred_fallthru
      _
    %v66 = vld [vmem:[%s0] sm:$0xf]
    %v67 = vld [vmem:[%s0 + $0x4] sm:$0xf]
    %v68 = vunpack.c.l.bf16 %v66
    %v69 = vunpack.c.l.bf16 %v67
    %v70 = vld [vmem:[#allocation5] sm:$0xff]
    %v71 = vld [vmem:[#allocation2] sm:$0xf]
    %v72 = vld [vmem:[#allocation2 + $0x4] sm:$0xf]
    %v73 = vunpack.c.l.bf16 %v71
    %v74 = vunpack.c.l.bf16 %v72
    %v75 = vld [vmem:[%s3] sm:$0xff]
    %v76 = vld [vmem:[%s3 + $0x8] sm:$0xff]
    %vm77 = vcmask 130048
    %v79 = vsel %vm77, %v73, 0
    %v82 = vsel %vm77, %v74, 0
    %84 = vmatprep.subr.mxu0 0.0
    %85 = vmatpush1.msra.mxu0 %v75
    %86 = vmatprep.subr.mxu0 0.0
    %87 = vmatpush1.msra.mxu0 %v76
    %88 = vmatprep.subr.mxu0 0.0
    %89 = vmatpush1.msra.mxu0 0.0
    %90 = vmatprep.subr.mxu0 0.0
    %91 = vmatpush1.msra.mxu0 0.0
    %92 = vmatprep.subr.mxu0 0.0
    %93 = vmatpush1.msra.mxu0 0.0
    %94 = vmatprep.subr.mxu0 0.0
    %95 = vmatpush1.msra.mxu0 0.0
    %96 = vmatprep.subr.mxu0 0.0
    %97 = vmatpush1.msra.mxu0 0.0
    %98 = vmatprep.subr.mxu0 0.0
    %99 = vmatpush1.msra.mxu0 0.0
    %100 = vmatprep.subr.mxu0 0.0
    %101 = vmatpush1.msra.mxu0 0.0
    %102 = vmatprep.subr.mxu0 0.0
    %103 = vmatpush1.msra.mxu0 0.0
    %104 = vmatprep.subr.mxu0 0.0
    %105 = vmatpush1.msra.mxu0 0.0
    %106 = vmatprep.subr.mxu0 0.0
    %107 = vmatpush1.msra.mxu0 0.0
    %108 = vmatprep.subr.mxu0 0.0
    %109 = vmatpush1.msra.mxu0 0.0
    %110 = vmatprep.subr.mxu0 0.0
    %111 = vmatpush1.msra.mxu0 0.0
    %112 = vmatprep.subr.mxu0 0.0
    %113 = vmatpush1.msra.mxu0 0.0
    %114 = vmatprep.subr.mxu0 0.0
    %115 = vmatpush1.msra.mxu0 0.0
    %116 = vmatprep.subr.mxu0 0.0
    %117 = vmatpush1.msra.mxu0 0.0
    %118 = vmatprep.subr.mxu0 0.0
    %119 = vmatpush1.msra.mxu0 0.0
    %120 = vmatprep.subr.mxu0 0.0
    %121 = vmatpush1.msra.mxu0 0.0
    %122 = vmatprep.subr.mxu0 0.0
    %123 = vmatpush1.msra.mxu0 0.0
    %124 = vmatprep.subr.mxu0 0.0
    %125 = vmatpush1.msra.mxu0 0.0
    %126 = vmatprep.subr.mxu0 0.0
    %127 = vmatpush1.msra.mxu0 0.0
    %128 = vmatprep.subr.mxu0 0.0
    %129 = vmatpush1.msra.mxu0 0.0
    %130 = vmatprep.subr.mxu0 0.0
    %131 = vmatpush1.msra.mxu0 0.0
    %132 = vmatprep.subr.mxu0 0.0
    %133 = vmatpush1.msra.mxu0 0.0
    %134 = vmatprep.subr.mxu0 0.0
    %135 = vmatpush1.msra.mxu0 0.0
    %136 = vmatprep.subr.mxu0 0.0
    %137 = vmatpush1.msra.mxu0 0.0
    %138 = vmatprep.subr.mxu0 0.0
    %139 = vmatpush1.msra.mxu0 0.0
    %140 = vmatprep.subr.mxu0 0.0
    %141 = vmatpush1.msra.mxu0 0.0
    %142 = vmatprep.subr.mxu0 0.0
    %143 = vmatpush1.msra.mxu0 0.0
    %144 = vmatprep.subr.mxu0 0.0
    %145 = vmatpush1.msra.mxu0 0.0
    %146 = vmatprep.subr.mxu0 0.0
    %147 = vmatpush1.msra.mxu0 0.0
    %148 = vmatprep.mubr.f32.mxu0 0.0
    %149 = vmatmul.mubr.f32.gmra.mrb[0].mxu0 %v79
    %v150 = vpop.f32.mrb[0].mxu0
    %v151 = vadd.f32 0.0, %v150
    %v152 = vpop.f32.mrb[0].mxu0
    %153 = vmatprep.mubr.f32.mxu0 0.0
    %154 = vmatmul.mubr.f32.gmra.mrb[0].mxu0 %v82
    %v155 = vpop.f32.mrb[0].mxu0
    %v156 = vadd.f32 0.0, %v155
    %v157 = vpop.f32.mrb[0].mxu0
    %158 = vdwg.mxu0
    %vm159 = vcmask 64512
    %v161 = vsel %vm159, %v68, 0
    %v164 = vsel %vm159, %v69, 0
    %166 = vmatprep.subr.mxu0 0.0
    %167 = vmatpush1.msra.mxu0 %v70
    %168 = vmatprep.subr.mxu0 0.0
    %169 = vmatpush1.msra.mxu0 0.0
    %170 = vmatprep.subr.mxu0 0.0
    %171 = vmatpush1.msra.mxu0 0.0
    %172 = vmatprep.subr.mxu0 0.0
    %173 = vmatpush1.msra.mxu0 0.0
    %174 = vmatprep.subr.mxu0 0.0
    %175 = vmatpush1.msra.mxu0 0.0
    %176 = vmatprep.subr.mxu0 0.0
    %177 = vmatpush1.msra.mxu0 0.0
    %178 = vmatprep.subr.mxu0 0.0
    %179 = vmatpush1.msra.mxu0 0.0
    %180 = vmatprep.subr.mxu0 0.0
    %181 = vmatpush1.msra.mxu0 0.0
    %182 = vmatprep.subr.mxu0 0.0
    %183 = vmatpush1.msra.mxu0 0.0
    %184 = vmatprep.subr.mxu0 0.0
    %185 = vmatpush1.msra.mxu0 0.0
    %186 = vmatprep.subr.mxu0 0.0
    %187 = vmatpush1.msra.mxu0 0.0
    %188 = vmatprep.subr.mxu0 0.0
    %189 = vmatpush1.msra.mxu0 0.0
    %190 = vmatprep.subr.mxu0 0.0
    %191 = vmatpush1.msra.mxu0 0.0
    %192 = vmatprep.subr.mxu0 0.0
    %193 = vmatpush1.msra.mxu0 0.0
    %194 = vmatprep.subr.mxu0 0.0
    %195 = vmatpush1.msra.mxu0 0.0
    %196 = vmatprep.subr.mxu0 0.0
    %197 = vmatpush1.msra.mxu0 0.0
    %198 = vmatprep.subr.mxu0 0.0
    %199 = vmatpush1.msra.mxu0 0.0
    %200 = vmatprep.subr.mxu0 0.0
    %201 = vmatpush1.msra.mxu0 0.0
    %202 = vmatprep.subr.mxu0 0.0
    %203 = vmatpush1.msra.mxu0 0.0
    %204 = vmatprep.subr.mxu0 0.0
    %205 = vmatpush1.msra.mxu0 0.0
    %206 = vmatprep.subr.mxu0 0.0
    %207 = vmatpush1.msra.mxu0 0.0
    %208 = vmatprep.subr.mxu0 0.0
    %209 = vmatpush1.msra.mxu0 0.0
    %210 = vmatprep.subr.mxu0 0.0
    %211 = vmatpush1.msra.mxu0 0.0
    %212 = vmatprep.subr.mxu0 0.0
    %213 = vmatpush1.msra.mxu0 0.0
    %214 = vmatprep.subr.mxu0 0.0
    %215 = vmatpush1.msra.mxu0 0.0
    %216 = vmatprep.subr.mxu0 0.0
    %217 = vmatpush1.msra.mxu0 0.0
    %218 = vmatprep.subr.mxu0 0.0
    %219 = vmatpush1.msra.mxu0 0.0
    %220 = vmatprep.subr.mxu0 0.0
    %221 = vmatpush1.msra.mxu0 0.0
    %222 = vmatprep.subr.mxu0 0.0
    %223 = vmatpush1.msra.mxu0 0.0
    %224 = vmatprep.subr.mxu0 0.0
    %225 = vmatpush1.msra.mxu0 0.0
    %226 = vmatprep.subr.mxu0 0.0
    %227 = vmatpush1.msra.mxu0 0.0
    %228 = vmatprep.subr.mxu0 0.0
    %229 = vmatpush1.msra.mxu0 0.0
    %230 = vmatprep.mubr.f32.mxu0 0.0
    %231 = vmatmul.mubr.f32.gmra.mrb[0].mxu0 %v161
    %v232 = vpop.f32.mrb[0].mxu0
    %v233 = vadd.f32 %v151, %v232
    %v234 = vpop.f32.mrb[0].mxu0
    %235 = vmatprep.mubr.f32.mxu0 0.0
    %236 = vmatmul.mubr.f32.gmra.mrb[0].mxu0 %v164
    %v237 = vpop.f32.mrb[0].mxu0
    %v238 = vadd.f32 %v156, %v237
    %v239 = vpop.f32.mrb[0].mxu0
    %240 = vdwg.mxu0
    %v241 = vld [vmem:[%s4] sm:$0x1]
    %v243 = vlaneseq
    %v244 = vshrl.u32 %v243, 7
    %v245 = vsub.s32 0, %v244
    %v246 = vrot.slane %v241, %v245
    %v248 = vadd.f32 %v233, %v246
    %v249 = vadd.f32 %v238, %v246
    %vm250 = vcmp.ge.f32.partialorder %v248, 0.0
    %vm251 = vcmp.ge.f32.partialorder %v249, 0.0
    %v252 = vmul.f32 %v248, 0.03
    %v253 = vmul.f32 %v249, 0.03
    %v254 = vsel %vm250, %v248, %v252
    %v255 = vsel %vm251, %v249, %v253
    %v256 = vld [vmem:[#allocation7] sm:$0xff]
    %v257 = vld [vmem:[#allocation7 + $0x8] sm:$0xff]
    %v258 = vld [vmem:[#allocation7 + $0x10] sm:$0xff]
    %v259 = vld [vmem:[#allocation7 + $0x18] sm:$0xff]
    %v260 = vld [vmem:[#allocation7 + $0x20] sm:$0xff]
    %v261 = vld [vmem:[#allocation7 + $0x28] sm:$0xff]
    %v262 = vld [vmem:[#allocation7 + $0x30] sm:$0xff]
    %v263 = vld [vmem:[#allocation7 + $0x38] sm:$0xff]
    %v264 = vld [vmem:[#allocation7 + $0x40] sm:$0xff]
    %v265 = vld [vmem:[#allocation7 + $0x48] sm:$0xff]
    %v266 = vld [vmem:[#allocation7 + $0x50] sm:$0xff]
    %v267 = vld [vmem:[#allocation7 + $0x58] sm:$0xff]
    %v268 = vld [vmem:[#allocation7 + $0x60] sm:$0xff]
    %v269 = vld [vmem:[#allocation7 + $0x68] sm:$0xff]
    %v270 = vld [vmem:[#allocation7 + $0x70] sm:$0xff]
    %v271 = vld [vmem:[#allocation7 + $0x78] sm:$0xff]
    %v272 = vld [vmem:[%s6] sm:$0x1]
    %v274 = vlaneseq
    %v275 = vshrl.u32 %v274, 7
    %v276 = vsub.s32 0, %v275
    %v277 = vrot.slane %v272, %v276
    %279 = vmatprep.subr.mxu0 0.0
    %280 = vmatpush1.msra.mxu0 %v256
    %281 = vmatprep.subr.mxu0 0.0
    %282 = vmatpush1.msra.mxu0 %v257
    %283 = vmatprep.subr.mxu0 0.0
    %284 = vmatpush1.msra.mxu0 %v258
    %285 = vmatprep.subr.mxu0 0.0
    %286 = vmatpush1.msra.mxu0 %v259
    %287 = vmatprep.subr.mxu0 0.0
    %288 = vmatpush1.msra.mxu0 %v260
    %289 = vmatprep.subr.mxu0 0.0
    %290 = vmatpush1.msra.mxu0 %v261
    %291 = vmatprep.subr.mxu0 0.0
    %292 = vmatpush1.msra.mxu0 %v262
    %293 = vmatprep.subr.mxu0 0.0
    %294 = vmatpush1.msra.mxu0 %v263
    %295 = vmatprep.subr.mxu0 0.0
    %296 = vmatpush1.msra.mxu0 %v264
    %297 = vmatprep.subr.mxu0 0.0
    %298 = vmatpush1.msra.mxu0 %v265
    %299 = vmatprep.subr.mxu0 0.0
    %300 = vmatpush1.msra.mxu0 %v266
    %301 = vmatprep.subr.mxu0 0.0
    %302 = vmatpush1.msra.mxu0 %v267
    %303 = vmatprep.subr.mxu0 0.0
    %304 = vmatpush1.msra.mxu0 %v268
    %305 = vmatprep.subr.mxu0 0.0
    %306 = vmatpush1.msra.mxu0 %v269
    %307 = vmatprep.subr.mxu0 0.0
    %308 = vmatpush1.msra.mxu0 %v270
    %309 = vmatprep.subr.mxu0 0.0
    %310 = vmatpush1.msra.mxu0 %v271
    %311 = vmatprep.subr.mxu0 0.0
    %312 = vmatpush1.msra.mxu0 0.0
    %313 = vmatprep.subr.mxu0 0.0
    %314 = vmatpush1.msra.mxu0 0.0
    %315 = vmatprep.subr.mxu0 0.0
    %316 = vmatpush1.msra.mxu0 0.0
    %317 = vmatprep.subr.mxu0 0.0
    %318 = vmatpush1.msra.mxu0 0.0
    %319 = vmatprep.subr.mxu0 0.0
    %320 = vmatpush1.msra.mxu0 0.0
    %321 = vmatprep.subr.mxu0 0.0
    %322 = vmatpush1.msra.mxu0 0.0
    %323 = vmatprep.subr.mxu0 0.0
    %324 = vmatpush1.msra.mxu0 0.0
    %325 = vmatprep.subr.mxu0 0.0
    %326 = vmatpush1.msra.mxu0 0.0
    %327 = vmatprep.subr.mxu0 0.0
    %328 = vmatpush1.msra.mxu0 0.0
    %329 = vmatprep.subr.mxu0 0.0
    %330 = vmatpush1.msra.mxu0 0.0
    %331 = vmatprep.subr.mxu0 0.0
    %332 = vmatpush1.msra.mxu0 0.0
    %333 = vmatprep.subr.mxu0 0.0
    %334 = vmatpush1.msra.mxu0 0.0
    %335 = vmatprep.subr.mxu0 0.0
    %336 = vmatpush1.msra.mxu0 0.0
    %337 = vmatprep.subr.mxu0 0.0
    %338 = vmatpush1.msra.mxu0 0.0
    %339 = vmatprep.subr.mxu0 0.0
    %340 = vmatpush1.msra.mxu0 0.0
    %341 = vmatprep.subr.mxu0 0.0
    %342 = vmatpush1.msra.mxu0 0.0
    %343 = vmatprep.mubr.f32.mxu0 0.0
    %344 = vmatmul.mubr.f32.gmra.mrb[0].mxu0 %v254
    %v345 = vpop.f32.mrb[0].mxu0
    %v346 = vadd.f32 %v277, %v345
    %v347 = vpop.f32.mrb[0].mxu0
    %348 = vmatprep.mubr.f32.mxu0 0.0
    %349 = vmatmul.mubr.f32.gmra.mrb[0].mxu0 %v255
    %v350 = vpop.f32.mrb[0].mxu0
    %v351 = vadd.f32 %v277, %v350
    %v352 = vpop.f32.mrb[0].mxu0
    %353 = vdwg.mxu0
    %v354 = vsub.f32 0.0, %v346
    %v355 = vsub.f32 0.0, %v351
    %v356 = vmul.f32 %v354, 1.442695
    %v357 = vpow.pop %v356
    %v358 = vmul.f32 %v355, 1.442695
    %v359 = vpow.pop %v358
    %v360 = vadd.f32 %v357, 1.0
    %v361 = vadd.f32 %v359, 1.0
    %v362 = vrcp.pop %v360
    %v363 = vrcp.pop %v361
    %v364 = vpack.c.bf16 %v363, %v362
    %v366 = vunpack.c.l.b16 %v364
    %v367 = vunpack.c.h.b16 %v364
    %v368 = vpack.c.b16 %v366, %v366
    %v369 = vpack.c.b16 %v367, %v367
    %372 = vst [vmem:[#allocation8] sm:$0xf] %v368
    %373 = vst [vmem:[#allocation8 + $0x4] sm:$0xf] %v369
    // Predicated region
    $region42: #{tpu_custom_call.1} parent=1 // pred_check
      _
    $region43: #{tpu_custom_call.1} parent=1 // pred_check_branch
      %375 = sbr.rel (0) target = $region45
    $region44: #{tpu_custom_call.1} parent=1 // pred_region
      %s377 = ssub.s32 128, 128
      %378 = vsyncadd [#allocation4], %s377
      %s379 = sshll.u32 [#allocation8], 4
      %s380 = int_to_ptr.vmem [resolvable:$true] %s379
      %385 = dma.vmem_to_hbm [thread:$0]  %s380, 128, %s7, [#allocation4], 64, 64, 4
    $region45: #{tpu_custom_call.1} parent=1 // pred_fallthru
      _
    // Predicated region
    $region46: #{tpu_custom_call.1} parent=1 // pred_check
      _
    $region47: #{tpu_custom_call.1} parent=1 // pred_check_branch
      %387 = sbr.rel (0) target = $region49
    $region48: #{tpu_custom_call.1} parent=1 // pred_region
      %388 = dma.done [#allocation4], 128
    $region49: #{tpu_custom_call.1} parent=1 // pred_fallthru
      _
    %389 = vsyncpa [#allocation3], 1
    %390 = vsyncpa [#allocation6], 1
    %391 = vsyncpa [#allocation4], 1

</llo_original>
